<compile_context>
chip_gen: v5e
topology: v5e:2x2
jax: 0.10.0
libtpu: 0.0.40
codegen_flags: <defaults>
</compile_context>

<pallas_src>
import functools
import math

import numpy as np

import jax
import jax.numpy as jnp
from jax.experimental import pallas as pl
from jax.experimental.pallas import tpu as pltpu


_IN_BUDGET_BYTES = 8 * 1024 * 1024     # per pipelined input buffer (sized as-if f32)
_ACC_BUDGET_BYTES = 4 * 1024 * 1024    # f32 accumulator tile budget (mid-axis path)
_VMEM_LIMIT_BYTES = 48 * 1024 * 1024   # scoped-VMEM cap (safe on v5e/v6e/v7x)
_FAST_PATH_BYTES = 512 * 1024          # below this, XLA's fused reduce wins
_TQ_CAP = 1024                         # lane-tile cap (multiple of 128)


def _min_sublane(dtype):
    """Minimum sensible tile along a sublane (second-to-last) axis per dtype."""
    bits = jnp.dtype(dtype).itemsize * 8
    return max(8, (32 * 8) // bits)     # 8 for f32, 16 for bf16, 32 for int8/fp8


# --------------------------------------------------------------------------
# Kernel 1: reduce the middle axis of a (P, N, Q) view.  Block = (tp, tn, tq),
# resident f32 accumulator of shape (tp, tq), reduction grid axis last.
# Tail masking only on the final reduction block.
# --------------------------------------------------------------------------
def _mean_mid_kernel(x_ref, o_ref, acc_ref, *, inv_n, n_total, tile_n, has_rem):
    k = pl.program_id(2)
    last = pl.num_programs(2) - 1

    @pl.when(k == 0)
    def _init():
        acc_ref[...] = jnp.zeros_like(acc_ref)

    @pl.when(k < last)
    def _body():
        acc_ref[...] += jnp.sum(x_ref[...].astype(jnp.float32), axis=1)

    @pl.when(k == last)
    def _finalize():
        xb = x_ref[...].astype(jnp.float32)
        if has_rem:
            # Exact tail handling: zero out rows past the true reduction length.
            row = jax.lax.broadcasted_iota(jnp.int32, xb.shape, 1)
            xb = jnp.where(k * tile_n + row < n_total, xb, 0.0)
        acc_ref[...] += jnp.sum(xb, axis=1)
        o_ref[...] = (acc_ref[...] * inv_n).astype(o_ref.dtype)


def _mean_mid_axis(x3, n_orig, tile_n, out_dtype):
    P, Nf, Qf = x3.shape
    itemsize = jnp.dtype(x3.dtype).itemsize
    base = _min_sublane(x3.dtype)

    # Lane tile: lane-dense multiple of 128 whenever Q allows it.
    if Qf % 128 == 0:
        tq = min(Qf, _TQ_CAP)
    elif Qf > 128:
        # Bounded lane tile; tail block handled by masked output write-back.
        tq = min((Qf // 128) * 128, _TQ_CAP)
    else:
        tq = Qf

    # P tile (second-to-last dim of the OUTPUT block -> multiple of 8 or full P),
    # bounded by both the f32-accumulator and the input-buffer budgets.
    tp_cap = min(256,
                 max(8, _ACC_BUDGET_BYTES // max(1, tq * 4)),
                 max(8, _IN_BUDGET_BYTES // max(1, tq * base * max(itemsize, 4))))
    tp_cap = max(8, (tp_cap // 8) * 8)
    tp = P if P <= tp_cap else tp_cap

    # Megacore (v7x): make sure the parallel grid has >= 2 blocks when the
    # problem is big enough, so both TensorCores stream HBM.
    if pl.cdiv(P, tp) * pl.cdiv(Qf, tq) < 2:
        if Qf >= 256 and tq > 128:
            tq = max(128, ((tq // 2) // 128) * 128)
        elif P >= 16 and tp > 8:
            tp = max(8, ((tp // 2) // 8) * 8)

    # Reduction tile: largest tile fitting the per-buffer budget (as-if f32,
    # which also bounds the in-kernel f32 upcast temporary).
    if tile_n is None:
        tn = _IN_BUDGET_BYTES // max(1, tp * tq * max(itemsize, 4))
        tn = max(base, (tn // base) * base)
    else:
        tn = max(1, int(tile_n))
    if tn >= Nf:
        tn = Nf
    elif tn % base != 0:
        tn = min(Nf, max(base, (tn // base) * base))

    has_rem = (Nf % tn) != 0
    grid = (pl.cdiv(P, tp), pl.cdiv(Qf, tq), pl.cdiv(Nf, tn))

    return pl.pallas_call(
        functools.partial(_mean_mid_kernel, inv_n=1.0 / n_orig, n_total=Nf,
                          tile_n=tn, has_rem=has_rem),
        out_shape=jax.ShapeDtypeStruct((P, Qf), out_dtype),
        grid_spec=pltpu.PrefetchScalarGridSpec(
            num_scalar_prefetch=0,
            grid=grid,
            in_specs=[pl.BlockSpec((tp, tn, tq), lambda i, j, k: (i, k, j))],
            out_specs=pl.BlockSpec((tp, tq), lambda i, j, k: (i, j)),
            scratch_shapes=[pltpu.VMEM((tp, tq), jnp.float32)],
        ),
        compiler_params=pltpu.CompilerParams(
            dimension_semantics=("parallel", "parallel", "arbitrary"),
            vmem_limit_bytes=_VMEM_LIMIT_BYTES,
        ),
    )(x3)


# --------------------------------------------------------------------------
# Kernel 2: reduce the LAST axis of a (P, N) view (Q == 1 case).  The
# reduction axis sits on lanes; each (tp, tn) block is folded into a small
# (tp, 128) f32 accumulator by element-wise summing 128-lane column groups.
# The single cross-lane XLU reduce happens only in the finalize step.
# --------------------------------------------------------------------------
def _mean_last_kernel(x_ref, o_ref, acc_ref, *, inv_n, n_total, tile_n,
                      has_rem, group_reduce):
    k = pl.program_id(1)
    last = pl.num_programs(1) - 1

    @pl.when(k == 0)
    def _init():
        acc_ref[...] = jnp.zeros_like(acc_ref)

    def _accumulate(xb):
        if group_reduce:
            tp, tn = xb.shape
            acc_ref[...] += jnp.sum(xb.reshape(tp, tn // 128, 128), axis=1)
        else:
            acc_ref[...] += xb

    @pl.when(k < last)
    def _body():
        _accumulate(x_ref[...].astype(jnp.float32))

    @pl.when(k == last)
    def _finalize():
        xb = x_ref[...].astype(jnp.float32)
        if has_rem:
            col = jax.lax.broadcasted_iota(jnp.int32, xb.shape, 1)
            xb = jnp.where(k * tile_n + col < n_total, xb, 0.0)
        _accumulate(xb)
        total = jnp.sum(acc_ref[...], axis=1, keepdims=True)
        o_ref[...] = (total * inv_n).astype(o_ref.dtype)


def _mean_last_axis(x2, n_orig, tile_n):
    P, N = x2.shape
    itemsize = jnp.dtype(x2.dtype).itemsize

    tp = P if P <= 256 else 256          # multiple of 8 (256) or full P
    # Megacore (v7x): split P into >= 2 parallel blocks when P is big enough.
    if pl.cdiv(P, tp) < 2 and P >= 16:
        tp = max(8, ((P // 2) // 8) * 8)

    if tile_n is None:
        tn = _IN_BUDGET_BYTES // max(1, tp * max(itemsize, 4))
        tn = max(128, (tn // 128) * 128)
    else:
        tn = max(1, int(tile_n))
    if tn >= N:
        tn = N
    elif tn % 128 != 0:
        tn = min(N, max(128, (tn // 128) * 128))

    has_rem = (N % tn) != 0
    group_reduce = (tn % 128 == 0)
    acc_shape = (tp, 128) if group_reduce else (tp, tn)
    grid = (pl.cdiv(P, tp), pl.cdiv(N, tn))

    out = pl.pallas_call(
        functools.partial(_mean_last_kernel, inv_n=1.0 / n_orig, n_total=N,
                          tile_n=tn, has_rem=has_rem, group_reduce=group_reduce),
        out_shape=jax.ShapeDtypeStruct((P, 1), x2.dtype),
        grid_spec=pltpu.PrefetchScalarGridSpec(
            num_scalar_prefetch=0,
            grid=grid,
            in_specs=[pl.BlockSpec((tp, tn), lambda i, k: (i, k))],
            out_specs=pl.BlockSpec((tp, 1), lambda i, k: (i, 0)),
            scratch_shapes=[pltpu.VMEM(acc_shape, jnp.float32)],
        ),
        compiler_params=pltpu.CompilerParams(
            dimension_semantics=("parallel", "arbitrary"),
            vmem_limit_bytes=_VMEM_LIMIT_BYTES,
        ),
    )(x2)
    return out[:, 0]


# --------------------------------------------------------------------------
# Public wrapper
# --------------------------------------------------------------------------
def pallas_mean(x, dim, *, tile_n=None, use_fast_path=True):
    """Mean over axis `dim`, matching torch.std_mean(x, dim)[1] semantics."""
    dim = dim % x.ndim
    shape = x.shape
    P = int(np.prod(shape[:dim], dtype=np.int64)) if dim > 0 else 1
    N = int(shape[dim])
    Q = int(np.prod(shape[dim + 1:], dtype=np.int64)) if dim + 1 < x.ndim else 1
    out_shape = shape[:dim] + shape[dim + 1:]

    # Small inputs: pallas launch + pipeline prologue dwarfs the reduction.
    if use_fast_path and x.size * jnp.dtype(x.dtype).itemsize < _FAST_PATH_BYTES:
        return jnp.mean(x, axis=dim)

    if Q == 1:
        # Reducing the trailing axis: use the lane-reduction kernel.
        out = _mean_last_axis(x.reshape(P, N), N, tile_n)
        return out.reshape(out_shape)

    # Lane density: if Q is not a multiple of 128, fold `f` consecutive rows of
    # the reduction axis into the lane dim (free, contiguous reshape), so every
    # block and the output store are 128-lane dense.  The f partial means are
    # combined with a tiny output-sized sum in the wrapper.
    fold = 1
    if Q % 128 != 0:
        cand = 128 // math.gcd(Q, 128)
        if cand > 1 and N % cand == 0:
            fold = cand

    Nf, Qf = N // fold, Q * fold
    x3 = x.reshape(P, Nf, Qf)
    kernel_out_dtype = jnp.float32 if fold > 1 else x.dtype

    out = _mean_mid_axis(x3, N, tile_n, kernel_out_dtype)   # (P, Qf), already /N
    if fold > 1:
        out = out.reshape(P, fold, Q).sum(axis=1).astype(x.dtype)
    return out.reshape(out_shape)


class Mean:
    """JAX/Pallas equivalent of glom_pytorch Mean(dim) (returns only the mean;
    the std produced by torch.std_mean is discarded by the original module)."""

    def __init__(self, dim):
        self.dim = dim

    def __call__(self, x):
        return pallas_mean(x, self.dim)


if __name__ == "__main__":
    key = jax.random.PRNGKey(0)
    keys = jax.random.split(key, 7)

    # glom-style input: (batch, tokens, hidden); Mean(dim=1) averages tokens.
    module = Mean(dim=1)
    x0 = jax.random.normal(keys[0], (2, 32, 128), dtype=jnp.float32)
    out0 = jax.block_until_ready(module(x0))
    ref0 = jnp.mean(x0, axis=1)
    assert out0.shape == ref0.shape
    assert jnp.allclose(out0, ref0, atol=1e-5, rtol=1e-5)

    # Force the pallas path once on the module's canonical shape as well.
    out0k = jax.block_until_ready(pallas_mean(x0, 1, use_fast_path=False))
    assert jnp.allclose(out0k, ref0, atol=1e-5, rtol=1e-5)

    # Extra coverage of the kernel paths.
    cases = [
        # (shape, dim, dtype, tile_n, tol)
        ((2, 24, 192), 1, jnp.float32, None, 1e-5),   # Q%128 != 0 -> N-fold into lanes
        ((4, 16, 256), 2, jnp.float32, None, 1e-5),   # reduce last axis (Q == 1 kernel)
        ((3, 40, 128), 1, jnp.float32, 16,   1e-5),   # forced tn -> tail-block masking
        ((2, 64, 128), 1, jnp.bfloat16, None, 2e-2),  # bf16 input, f32 accumulation
        ((6, 8),       0, jnp.float32, None, 1e-5),   # 2-D input, leading-axis reduce
    ]
    for (shp, d, dt, tn, tol), k in zip(cases, keys[2:]):
        x = jax.random.normal(k, shp, dtype=jnp.float32).astype(dt)
        out = jax.block_until_ready(
            pallas_mean(x, d, tile_n=tn, use_fast_path=False))
        ref = jnp.mean(x.astype(jnp.float32), axis=d).astype(dt)
        assert out.shape == ref.shape, (shp, d, out.shape, ref.shape)
        assert jnp.allclose(out.astype(jnp.float32), ref.astype(jnp.float32),
                            atol=tol, rtol=tol), (shp, d, dt)

    print("KERNEL_OK")
</pallas_src>

<mosaic_0001>
module attributes {stable_mosaic.version = 11 : i64} {
  func.func @_mean_mid_kernel(%arg0: i32, %arg1: i32, %arg2: i32, %arg3: memref<2x32x128xf32, #tpu.memory_space<vmem>>, %arg4: memref<2x128xf32, #tpu.memory_space<vmem>>, %arg5: memref<2x128xf32, #tpu.memory_space<vmem>>) attributes {dimension_semantics = [#tpu.dimension_semantics<parallel>, #tpu.dimension_semantics<parallel>, #tpu.dimension_semantics<arbitrary>], iteration_bounds = array<i64: 1, 1, 1>, scalar_prefetch = 0 : i64, scratch_operands = 1 : i64, tpu.core_type = #tpu.core_type<tc>, window_params = [{transform_indices = @transform_0, window_bounds = array<i64: 2, 32, 128>}, {transform_indices = @transform_1, window_bounds = array<i64: 2, 128>}]} {
    %c0_i32 = arith.constant 0 : i32
    %0 = arith.cmpi eq, %arg2, %c0_i32 : i32
    %1 = arith.extui %0 : i1 to i32
    %c0_i32_0 = arith.constant 0 : i32
    %2 = arith.cmpi ne, %1, %c0_i32_0 : i32
    scf.if %2 {
      %cst = arith.constant 0.000000e+00 : f32
      %9 = vector.broadcast %cst : f32 to vector<2x128xf32>
      %c0 = arith.constant 0 : index
      %c0_5 = arith.constant 0 : index
      %10 = vector.load %arg5[%c0, %c0_5] : memref<2x128xf32, #tpu.memory_space<vmem>>, vector<2x128xf32>
      tpu.vector_store %arg5[%c0, %c0_5], %9 {strides = array<i32>} : memref<2x128xf32, #tpu.memory_space<vmem>>, vector<2x128xf32>,
    } else {
    }
    %c0_i32_1 = arith.constant 0 : i32
    %3 = arith.cmpi slt, %arg2, %c0_i32_1 : i32
    %4 = arith.extui %3 : i1 to i32
    %c0_i32_2 = arith.constant 0 : i32
    %5 = arith.cmpi ne, %4, %c0_i32_2 : i32
    scf.if %5 {
      %c0 = arith.constant 0 : index
      %c0_5 = arith.constant 0 : index
      %9 = vector.load %arg5[%c0, %c0_5] : memref<2x128xf32, #tpu.memory_space<vmem>>, vector<2x128xf32>
      %c0_6 = arith.constant 0 : index
      %c0_7 = arith.constant 0 : index
      %c0_8 = arith.constant 0 : index
      %10 = vector.load %arg3[%c0_6, %c0_7, %c0_8] : memref<2x32x128xf32, #tpu.memory_space<vmem>>, vector<2x32x128xf32>
      %cst = arith.constant dense<0.000000e+00> : vector<2x128xf32>
      %11 = vector.multi_reduction <add>, %10, %cst [1] : vector<2x32x128xf32> to vector<2x128xf32>
      %12 = arith.addf %9, %11 : vector<2x128xf32>
      %c0_9 = arith.constant 0 : index
      %c0_10 = arith.constant 0 : index
      %13 = vector.load %arg5[%c0_9, %c0_10] : memref<2x128xf32, #tpu.memory_space<vmem>>, vector<2x128xf32>
      tpu.vector_store %arg5[%c0_9, %c0_10], %12 {strides = array<i32>} : memref<2x128xf32, #tpu.memory_space<vmem>>, vector<2x128xf32>,
    } else {
    }
    %c0_i32_3 = arith.constant 0 : i32
    %6 = arith.cmpi eq, %arg2, %c0_i32_3 : i32
    %7 = arith.extui %6 : i1 to i32
    %c0_i32_4 = arith.constant 0 : i32
    %8 = arith.cmpi ne, %7, %c0_i32_4 : i32
    scf.if %8 {
      %c0 = arith.constant 0 : index
      %c0_5 = arith.constant 0 : index
      %c0_6 = arith.constant 0 : index
      %9 = vector.load %arg3[%c0, %c0_5, %c0_6] : memref<2x32x128xf32, #tpu.memory_space<vmem>>, vector<2x32x128xf32>
      %c0_7 = arith.constant 0 : index
      %c0_8 = arith.constant 0 : index
      %10 = vector.load %arg5[%c0_7, %c0_8] : memref<2x128xf32, #tpu.memory_space<vmem>>, vector<2x128xf32>
      %cst = arith.constant dense<0.000000e+00> : vector<2x128xf32>
      %11 = vector.multi_reduction <add>, %9, %cst [1] : vector<2x32x128xf32> to vector<2x128xf32>
      %12 = arith.addf %10, %11 : vector<2x128xf32>
      %c0_9 = arith.constant 0 : index
      %c0_10 = arith.constant 0 : index
      %13 = vector.load %arg5[%c0_9, %c0_10] : memref<2x128xf32, #tpu.memory_space<vmem>>, vector<2x128xf32>
      tpu.vector_store %arg5[%c0_9, %c0_10], %12 {strides = array<i32>} : memref<2x128xf32, #tpu.memory_space<vmem>>, vector<2x128xf32>,
      %c0_11 = arith.constant 0 : index
      %c0_12 = arith.constant 0 : index
      %14 = vector.load %arg5[%c0_11, %c0_12] : memref<2x128xf32, #tpu.memory_space<vmem>>, vector<2x128xf32>
      %cst_13 = arith.constant 3.125000e-02 : f32
      %15 = vector.broadcast %cst_13 : f32 to vector<2x128xf32>
      %16 = arith.mulf %14, %15 : vector<2x128xf32>
      %c0_14 = arith.constant 0 : index
      %c0_15 = arith.constant 0 : index
      %17 = vector.load %arg4[%c0_14, %c0_15] : memref<2x128xf32, #tpu.memory_space<vmem>>, vector<2x128xf32>
      tpu.vector_store %arg4[%c0_14, %c0_15], %16 {strides = array<i32>} : memref<2x128xf32, #tpu.memory_space<vmem>>, vector<2x128xf32>,
    } else {
    }
    return
  }
  func.func @transform_0(%arg0: i32, %arg1: i32, %arg2: i32) -> (i32, i32, i32) {
    %c0_i32 = arith.constant 0 : i32
    return %arg0, %arg2, %arg1 : i32, i32, i32
  }
  func.func @transform_1(%arg0: i32, %arg1: i32, %arg2: i32) -> (i32, i32) {
    %c0_i32 = arith.constant 0 : i32
    return %arg0, %arg1 : i32, i32
  }
}

</mosaic_0001>

<llo_original>
// kernel: tpu_custom_call.1
$region0: #{tpu_custom_call.1}
  #allocation0 [shape = 'u32[]', space=smem, size = 0x4, offset = 0x4, fixed_abs, tag = 'smem constant byte address 0x4 - core index']
  #allocation1 [shape = 'u32[72,128]{1,0:T(1,128)}', space=vmem, size = 0x9000, scoped, tag = 'internal scratch']
  #allocation2 [shape = 'f32[2,128]{1,0:T(2,128)}', space=vmem, size = 0x400, scoped, tag = 'scratch operand']
  %s0 = inlined_call_operand.hbm [shape: f32[2,32,128], index: 0, kind: input, shape index: {}]
  %s1 = inlined_call_operand.hbm [shape: f32[2,128], index: 1, kind: output, shape index: {}]
  %s2 = sld [smem:[#allocation0]]
  $region30: #{tpu_custom_call.1} parent=0
    _
  %s4 = ssub.s32 1, %s2
  %s5 = scalar_select 0, %s4, %s2
  $region1: #{tpu_custom_call.1} parent=0
    #allocation3 [shape = 'u8[32768]{0}', space=vmem, size = 0x8000, scoped, tag = 'input window, operand 0, single buffered']
    #allocation4 [shape = 's32[1]{0}', space=sflag, size = 0x4, scoped, tag = 'scoped memory for tpu_custom_call.1']
    #allocation5 [shape = 's32[1]{0}', space=sflag, size = 0x4, scoped, tag = 'scoped memory for tpu_custom_call.1']
    #allocation6 [shape = 'u8[1024]{0}', space=vmem, size = 0x400, scoped, tag = 'output window, operand 0, single buffered']
    %6 = vsyncpa [#allocation4], 0
    %7 = vsyncpa [#allocation5], 0
    // Predicated region
    $region2: #{tpu_custom_call.1} parent=1 // pred_check
      _
    $region3: #{tpu_custom_call.1} parent=1 // pred_check_branch
      %9 = sbr.rel (0) target = $region5
    $region4: #{tpu_custom_call.1} parent=1 // pred_region
      %11 = vsyncadd [#allocation4], 0
      %s12 = sshll.u32 %s0, 4
      %s13 = int_to_ptr.hbm [resolvable:$true] %s12
      %s14 = sshll.u32 [#allocation3], 4
      %s15 = int_to_ptr.vmem [resolvable:$true] %s14
      %20 = dma.hbm_to_vmem [thread:$0]  %s13, 1024, %s15, [#allocation4], 128, 128, 8
    $region5: #{tpu_custom_call.1} parent=1 // pred_fallthru
      _
    // Predicated region
    $region6: #{tpu_custom_call.1} parent=1 // pred_check
      _
    $region7: #{tpu_custom_call.1} parent=1 // pred_check_branch
      %22 = sbr.rel (0) target = $region9
    $region8: #{tpu_custom_call.1} parent=1 // pred_region
      %24 = dma.done [#allocation4], 1024
    $region9: #{tpu_custom_call.1} parent=1 // pred_fallthru
      _
    %p25 = scmp.eq.s32.totalorder 0, 0
    // Predicated region
    $region10: #{tpu_custom_call.1} parent=1 // pred_check
      %p26 = pneg %p25
    $region11: #{tpu_custom_call.1} parent=1 // pred_check_branch
      %28 = sbr.rel (%p26) target = $region13
    $region12: #{tpu_custom_call.1} parent=1 // pred_region
      %29 = vst [vmem:[#allocation2] sm:$0x3] 0.0
    $region13: #{tpu_custom_call.1} parent=1 // pred_fallthru
      _
    %p30 = scmp.lt.s32.totalorder 0, 0
    // Predicated region
    $region14: #{tpu_custom_call.1} parent=1 // pred_check
      %p31 = pneg %p30
    $region15: #{tpu_custom_call.1} parent=1 // pred_check_branch
      %33 = sbr.rel (%p31) target = $region17
    $region16: #{tpu_custom_call.1} parent=1 // pred_region
      %v34 = vld [vmem:[#allocation2] sm:$0x3]
      %v35 = vld [vmem:[#allocation3] sm:$0xff]
      %v36 = vld [vmem:[#allocation3 + $0x8] sm:$0xff]
      %v37 = vld [vmem:[#allocation3 + $0x10] sm:$0xff]
      %v38 = vld [vmem:[#allocation3 + $0x18] sm:$0xff]
      %v39 = vld [vmem:[#allocation3 + $0x20] sm:$0xff]
      %v40 = vld [vmem:[#allocation3 + $0x28] sm:$0xff]
      %v41 = vld [vmem:[#allocation3 + $0x30] sm:$0xff]
      %v42 = vld [vmem:[#allocation3 + $0x38] sm:$0xff]
      %v43 = vadd.f32 %v35, %v36
      %v44 = vadd.f32 %v43, %v37
      %v45 = vadd.f32 %v44, %v38
      %v46 = vrot.slane %v45, 4
      %v47 = vadd.f32 %v45, %v46
      %v48 = vrot.slane %v47, 2
      %v49 = vadd.f32 %v47, %v48
      %v50 = vrot.slane %v49, 1
      %v51 = vadd.f32 %v49, %v50
      %v52 = vadd.f32 %v39, %v40
      %v53 = vadd.f32 %v52, %v41
      %v54 = vadd.f32 %v53, %v42
      %v55 = vrot.slane %v54, 4
      %v56 = vadd.f32 %v54, %v55
      %v57 = vrot.slane %v56, 2
      %v58 = vadd.f32 %v56, %v57
      %v59 = vrot.slane %v58, 1
      %v60 = vadd.f32 %v58, %v59
      %vm63 = vcmask 1041409
      %v64 = vsel %vm63, %v60, %v51
      %v66 = vadd.f32 %v34, %v64
      %67 = vst [vmem:[#allocation2] sm:$0x3] %v66
    $region17: #{tpu_custom_call.1} parent=1 // pred_fallthru
      _
    // Predicated region
    $region18: #{tpu_custom_call.1} parent=1 // pred_check
      %p68 = pneg %p25
    $region19: #{tpu_custom_call.1} parent=1 // pred_check_branch
      %70 = sbr.rel (%p68) target = $region21
    $region20: #{tpu_custom_call.1} parent=1 // pred_region
      %v71 = vld [vmem:[#allocation3] sm:$0xff]
      %v72 = vld [vmem:[#allocation3 + $0x8] sm:$0xff]
      %v73 = vld [vmem:[#allocation3 + $0x10] sm:$0xff]
      %v74 = vld [vmem:[#allocation3 + $0x18] sm:$0xff]
      %v75 = vld [vmem:[#allocation3 + $0x20] sm:$0xff]
      %v76 = vld [vmem:[#allocation3 + $0x28] sm:$0xff]
      %v77 = vld [vmem:[#allocation3 + $0x30] sm:$0xff]
      %v78 = vld [vmem:[#allocation3 + $0x38] sm:$0xff]
      %v79 = vld [vmem:[#allocation2] sm:$0x3]
      %v80 = vadd.f32 %v71, %v72
      %v81 = vadd.f32 %v80, %v73
      %v82 = vadd.f32 %v81, %v74
      %v83 = vrot.slane %v82, 4
      %v84 = vadd.f32 %v82, %v83
      %v85 = vrot.slane %v84, 2
      %v86 = vadd.f32 %v84, %v85
      %v87 = vrot.slane %v86, 1
      %v88 = vadd.f32 %v86, %v87
      %v89 = vadd.f32 %v75, %v76
      %v90 = vadd.f32 %v89, %v77
      %v91 = vadd.f32 %v90, %v78
      %v92 = vrot.slane %v91, 4
      %v93 = vadd.f32 %v91, %v92
      %v94 = vrot.slane %v93, 2
      %v95 = vadd.f32 %v93, %v94
      %v96 = vrot.slane %v95, 1
      %v97 = vadd.f32 %v95, %v96
      %vm100 = vcmask 1041409
      %v101 = vsel %vm100, %v97, %v88
      %v103 = vadd.f32 %v79, %v101
      %104 = vst [vmem:[#allocation2] sm:$0x3] %v103
      %v105 = vld [vmem:[#allocation2] sm:$0x3]
      %v106 = vmul.f32 %v105, 0.03125
      %107 = vst [vmem:[#allocation6] sm:$0x3] %v106
    $region21: #{tpu_custom_call.1} parent=1 // pred_fallthru
      _
    // Predicated region
    $region22: #{tpu_custom_call.1} parent=1 // pred_check
      _
    $region23: #{tpu_custom_call.1} parent=1 // pred_check_branch
      %109 = sbr.rel (0) target = $region25
    $region24: #{tpu_custom_call.1} parent=1 // pred_region
      %111 = vsyncadd [#allocation5], 0
      %s113 = sshll.u32 [#allocation6], 4
      %s114 = int_to_ptr.vmem [resolvable:$true] %s113
      %s115 = sshll.u32 %s1, 4
      %s116 = int_to_ptr.hbm [resolvable:$true] %s115
      %118 = dma.vmem_to_hbm [thread:$0]  %s114, 32, %s116, [#allocation5]
    $region25: #{tpu_custom_call.1} parent=1 // pred_fallthru
      _
    // Predicated region
    $region26: #{tpu_custom_call.1} parent=1 // pred_check
      _
    $region27: #{tpu_custom_call.1} parent=1 // pred_check_branch
      %120 = sbr.rel (0) target = $region29
    $region28: #{tpu_custom_call.1} parent=1 // pred_region
      %122 = dma.done [#allocation5], 32
    $region29: #{tpu_custom_call.1} parent=1 // pred_fallthru
      _
    %123 = vsyncpa [#allocation4], 1
    %124 = vsyncpa [#allocation5], 1

</llo_original>
